<compile_context>
chip_gen: v5e
topology: v5e:2x2
jax: 0.10.0
libtpu: 0.0.40
codegen_flags: <defaults>
</compile_context>

<pallas_src>
import jax
import jax.numpy as jnp
from jax.experimental import pallas as pl
from jax.experimental.pallas import tpu as pltpu


def _round_up(x, m):
    return (x + m - 1) // m * m


def _fused_mlp_kernel(*refs, n_layers):
    """Fused MLP forward.

    refs = (x_ref, w0_ref, b0_ref, ..., w{L-1}_ref, b{L-1}_ref, out_ref)
    Weights are bf16 (padded rows/cols are zero); biases are f32 (final-layer
    padded columns are -1e30 so padded logits drop out of the softmax).
    """
    x_ref = refs[0]
    out_ref = refs[-1]
    wb = refs[1:-1]

    h = x_ref[...]  # f32 (tm, d_in)
    # Hidden layers: relu(x @ W + b). Unrolled at trace time; activations
    # never leave vregs/VMEM. bf16 operands feed the MXU, f32 accumulate.
    for l in range(n_layers - 1):
        w = wb[2 * l][...]          # bf16
        b = wb[2 * l + 1][...]      # f32
        h = jnp.maximum(
            jnp.dot(h.astype(jnp.bfloat16), w,
                    preferred_element_type=jnp.float32) + b,
            0.0,
        )

    # Output layer + log_softmax. Padded logit columns equal -1e30 via the
    # pre-padded bias (weights in those columns are zero), so no masking ops.
    w = wb[-2][...]
    b = wb[-1][...]
    z = jnp.dot(h.astype(jnp.bfloat16), w,
                preferred_element_type=jnp.float32) + b

    z_max = jnp.max(z, axis=-1, keepdims=True)
    shifted = z - z_max
    lse = jnp.log(jnp.sum(jnp.exp(shifted), axis=-1, keepdims=True))
    out_ref[...] = (shifted - lse).astype(out_ref.dtype)


def init_params(key, input_size, output_size, hidden_layers):
    """Deterministic init matching nn.Linear default (uniform +-1/sqrt(fan_in)).

    Weights are stored as (in_features, out_features); biases as (1, out).
    """
    sizes = [input_size] + list(hidden_layers) + [output_size]
    params = []
    for d_in, d_out in zip(sizes[:-1], sizes[1:]):
        key, kw, kb = jax.random.split(key, 3)
        bound = 1.0 / (d_in ** 0.5)
        w = jax.random.uniform(kw, (d_in, d_out), jnp.float32, -bound, bound)
        b = jax.random.uniform(kb, (1, d_out), jnp.float32, -bound, bound)
        params.append((w, b))
    return params


def pad_params(params):
    """One-time prep of weights/biases for the fused kernel.

    * Output feature dims padded to multiples of 128 (lane-dense matmuls/stores).
    * First-layer input dim kept at its TRUE size (x is not padded in the
      wrapper); later layers' input dims match the previous padded output dim.
    * Weights cast to bf16 (MXU-native); biases stay f32.
    * Final layer's padded bias columns are -1e30 so padded logits vanish in
      the log_softmax without any in-kernel masking.
    """
    padded = []
    n = len(params)
    prev_out_p = None
    for idx, (w, b) in enumerate(params):
        d_in, d_out = w.shape
        d_in_p = d_in if idx == 0 else prev_out_p
        d_out_p = _round_up(d_out, 128)
        w_p = (
            jnp.zeros((d_in_p, d_out_p), jnp.float32)
            .at[:d_in, :d_out].set(w)
            .astype(jnp.bfloat16)
        )
        if idx == n - 1:
            b_p = jnp.full((1, d_out_p), -1e30, jnp.float32)
        else:
            b_p = jnp.zeros((1, d_out_p), jnp.float32)
        b_p = b_p.at[:, :d_out].set(jnp.reshape(b, (1, d_out)))
        padded.append((w_p, b_p))
        prev_out_p = d_out_p
    return padded


@jax.jit
def network_forward(x, padded_params):
    """Forward pass of `Network` as ONE fused Pallas kernel.

    x: (B, input_size) f32.  padded_params: output of pad_params().
    Returns (B, d_out_padded) log-probabilities; columns >= output_size are
    ~-1e30 (exp -> 0).  The consumer slices [:, :output_size] lazily.
    """
    B, d_in = x.shape
    d_out_p = padded_params[-1][0].shape[1]
    n_layers = len(padded_params)

    # Batch tile: at least 2 tiles whenever B > 8 (v7x dual-TensorCore sharding
    # via the "parallel" grid axis), capped at 512 rows per tile.
    if B <= 8:
        tm = 8
    else:
        tm = min(512, _round_up(-(-B // 2), 8))
    grid = (-(-B // tm),)  # cdiv; ragged last tile: OOB reads are discarded rows,
                           # OOB output stores are masked by Pallas.

    flat_wb = []
    in_specs = [pl.BlockSpec((tm, d_in), lambda i: (i, 0))]
    for w_p, b_p in padded_params:
        flat_wb.append(w_p)
        flat_wb.append(b_p)
        # Constant block index -> loaded once, VMEM-resident across all tiles.
        in_specs.append(pl.BlockSpec(w_p.shape, lambda i: (0, 0)))
        in_specs.append(pl.BlockSpec(b_p.shape, lambda i: (0, 0)))

    # VMEM budget: double-buffered x/out tiles + (conservatively doubled)
    # resident weights + activation headroom, clamped to [32 MiB, 64 MiB]
    # so it is valid on v5e/v6e (128 MiB) and v7x (64 MiB).
    weight_bytes = sum(
        w.size * w.dtype.itemsize + b.size * b.dtype.itemsize
        for w, b in padded_params
    )
    max_width = max([d_in] + [w.shape[1] for w, _ in padded_params])
    io_bytes = 2 * tm * (d_in + d_out_p) * 4
    act_bytes = 4 * tm * max_width * 4
    vmem_limit = int(
        min(max(2 * weight_bytes + io_bytes + act_bytes + (4 << 20), 32 << 20),
            64 << 20)
    )

    # Scheduler hint for XLA around the custom call.
    flops = 2 * B * sum(w.shape[0] * w.shape[1] for w, _ in padded_params)
    bytes_accessed = x.size * 4 + weight_bytes + B * d_out_p * 4
    cost = pl.CostEstimate(
        flops=flops,
        transcendentals=B * d_out_p,
        bytes_accessed=bytes_accessed,
    )

    def kernel(*refs):
        _fused_mlp_kernel(*refs, n_layers=n_layers)

    out_p = pl.pallas_call(
        kernel,
        out_shape=jax.ShapeDtypeStruct((B, d_out_p), jnp.float32),
        grid=grid,
        in_specs=in_specs,
        out_specs=pl.BlockSpec((tm, d_out_p), lambda i: (i, 0)),
        compiler_params=pltpu.CompilerParams(
            dimension_semantics=("parallel",),
            vmem_limit_bytes=vmem_limit,
        ),
        cost_estimate=cost,
    )(x, *flat_wb)

    return out_p


def reference_forward(x, params):
    out = x
    for w, b in params[:-1]:
        out = jnp.maximum(out @ w + b, 0.0)
    w_out, b_out = params[-1]
    z = out @ w_out + b_out
    return jax.nn.log_softmax(z, axis=1)


if __name__ == "__main__":
    # Small shapes consistent with the module's MLP structure.
    batch = 8
    input_size = 32
    hidden_layers = [64, 32]
    output_size = 10

    key = jax.random.PRNGKey(0)
    key, kx = jax.random.split(key)
    x = jax.random.normal(kx, (batch, input_size), jnp.float32)

    params = init_params(key, input_size, output_size, hidden_layers)
    padded = pad_params(params)

    out_padded = jax.block_until_ready(network_forward(x, padded))
    out = out_padded[:, :output_size]  # consumer-side slice of lane-dense output

    ref = reference_forward(x, params)
    assert out.shape == (batch, output_size)
    err = float(jnp.max(jnp.abs(out - ref)))
    assert err < 5e-2, f"mismatch vs reference: {err}"  # bf16 matmul tolerance
    # log_softmax rows should exp-sum to 1 (padded logits contribute ~0)
    assert jnp.allclose(jnp.sum(jnp.exp(out), axis=1), 1.0, atol=1e-3)

    # Ragged larger batch exercises the multi-tile (dual-TensorCore) grid path.
    key, kx2 = jax.random.split(key)
    x_big = jax.random.normal(kx2, (300, input_size), jnp.float32)
    out_big = jax.block_until_ready(network_forward(x_big, padded))
    out_big = out_big[:, :output_size]
    ref_big = reference_forward(x_big, params)
    assert out_big.shape == (300, output_size)
    err_big = float(jnp.max(jnp.abs(out_big - ref_big)))
    assert err_big < 5e-2, f"tiled mismatch: {err_big}"

    print("KERNEL_OK")
</pallas_src>

<mosaic_0001>
module attributes {stable_mosaic.version = 11 : i64} {
  func.func @kernel(%arg0: i32, %arg1: memref<8x32xf32, #tpu.memory_space<vmem>>, %arg2: memref<32x128xbf16, #tpu.memory_space<vmem>>, %arg3: memref<1x128xf32, #tpu.memory_space<vmem>>, %arg4: memref<128x128xbf16, #tpu.memory_space<vmem>>, %arg5: memref<1x128xf32, #tpu.memory_space<vmem>>, %arg6: memref<128x128xbf16, #tpu.memory_space<vmem>>, %arg7: memref<1x128xf32, #tpu.memory_space<vmem>>, %arg8: memref<8x128xf32, #tpu.memory_space<vmem>>) attributes {dimension_semantics = [#tpu.dimension_semantics<parallel>], iteration_bounds = array<i64: 1>, scalar_prefetch = 0 : i64, scratch_operands = 0 : i64, tpu.core_type = #tpu.core_type<tc>, window_params = [{transform_indices = @transform_0, window_bounds = array<i64: 8, 32>}, {pipeline_mode = #tpu.pipeline_mode<synchronous>, transform_indices = @transform_1, window_bounds = array<i64: 32, 128>}, {pipeline_mode = #tpu.pipeline_mode<synchronous>, transform_indices = @transform_2, window_bounds = array<i64: 1, 128>}, {pipeline_mode = #tpu.pipeline_mode<synchronous>, transform_indices = @transform_3, window_bounds = array<i64: 128, 128>}, {pipeline_mode = #tpu.pipeline_mode<synchronous>, transform_indices = @transform_4, window_bounds = array<i64: 1, 128>}, {pipeline_mode = #tpu.pipeline_mode<synchronous>, transform_indices = @transform_5, window_bounds = array<i64: 128, 128>}, {pipeline_mode = #tpu.pipeline_mode<synchronous>, transform_indices = @transform_6, window_bounds = array<i64: 1, 128>}, {transform_indices = @transform_7, window_bounds = array<i64: 8, 128>}]} {
    %c0 = arith.constant 0 : index
    %c0_0 = arith.constant 0 : index
    %0 = vector.load %arg1[%c0, %c0_0] : memref<8x32xf32, #tpu.memory_space<vmem>>, vector<8x32xf32>
    %c0_1 = arith.constant 0 : index
    %c0_2 = arith.constant 0 : index
    %1 = vector.load %arg2[%c0_1, %c0_2] : memref<32x128xbf16, #tpu.memory_space<vmem>>, vector<32x128xbf16>
    %c0_3 = arith.constant 0 : index
    %c0_4 = arith.constant 0 : index
    %2 = vector.load %arg3[%c0_3, %c0_4] : memref<1x128xf32, #tpu.memory_space<vmem>>, vector<1x128xf32>
    %3 = arith.truncf %0 : vector<8x32xf32> to vector<8x32xbf16>
    %cst = arith.constant dense<0.000000e+00> : vector<8x128xf32>
    %4 = tpu.matmul %3, %1, %cst {dimension_numbers = #tpu.dot_dimension_numbers<[1], [0], [0], [1], [0, 0, 1, 1], [], []>} : vector<8x32xbf16>, vector<32x128xbf16>, vector<8x128xf32> -> vector<8x128xf32>
    %5 = vector.broadcast %2 : vector<1x128xf32> to vector<8x128xf32>
    %6 = arith.addf %4, %5 : vector<8x128xf32>
    %cst_5 = arith.constant 0.000000e+00 : f32
    %7 = vector.broadcast %cst_5 : f32 to vector<8x128xf32>
    %8 = arith.maximumf %6, %7 : vector<8x128xf32>
    %c0_6 = arith.constant 0 : index
    %c0_7 = arith.constant 0 : index
    %9 = vector.load %arg4[%c0_6, %c0_7] : memref<128x128xbf16, #tpu.memory_space<vmem>>, vector<128x128xbf16>
    %c0_8 = arith.constant 0 : index
    %c0_9 = arith.constant 0 : index
    %10 = vector.load %arg5[%c0_8, %c0_9] : memref<1x128xf32, #tpu.memory_space<vmem>>, vector<1x128xf32>
    %11 = arith.truncf %8 : vector<8x128xf32> to vector<8x128xbf16>
    %cst_10 = arith.constant dense<0.000000e+00> : vector<8x128xf32>
    %12 = tpu.matmul %11, %9, %cst_10 {dimension_numbers = #tpu.dot_dimension_numbers<[1], [0], [0], [1], [0, 0, 1, 1], [], []>} : vector<8x128xbf16>, vector<128x128xbf16>, vector<8x128xf32> -> vector<8x128xf32>
    %13 = vector.broadcast %10 : vector<1x128xf32> to vector<8x128xf32>
    %14 = arith.addf %12, %13 : vector<8x128xf32>
    %cst_11 = arith.constant 0.000000e+00 : f32
    %15 = vector.broadcast %cst_11 : f32 to vector<8x128xf32>
    %16 = arith.maximumf %14, %15 : vector<8x128xf32>
    %c0_12 = arith.constant 0 : index
    %c0_13 = arith.constant 0 : index
    %17 = vector.load %arg6[%c0_12, %c0_13] : memref<128x128xbf16, #tpu.memory_space<vmem>>, vector<128x128xbf16>
    %c0_14 = arith.constant 0 : index
    %c0_15 = arith.constant 0 : index
    %18 = vector.load %arg7[%c0_14, %c0_15] : memref<1x128xf32, #tpu.memory_space<vmem>>, vector<1x128xf32>
    %19 = arith.truncf %16 : vector<8x128xf32> to vector<8x128xbf16>
    %cst_16 = arith.constant dense<0.000000e+00> : vector<8x128xf32>
    %20 = tpu.matmul %19, %17, %cst_16 {dimension_numbers = #tpu.dot_dimension_numbers<[1], [0], [0], [1], [0, 0, 1, 1], [], []>} : vector<8x128xbf16>, vector<128x128xbf16>, vector<8x128xf32> -> vector<8x128xf32>
    %21 = vector.broadcast %18 : vector<1x128xf32> to vector<8x128xf32>
    %22 = arith.addf %20, %21 : vector<8x128xf32>
    %cst_17 = arith.constant dense<0xFF800000> : vector<8xf32>
    %23 = vector.multi_reduction <maximumf>, %22, %cst_17 [1] : vector<8x128xf32> to vector<8xf32>
    %24 = vector.shape_cast %23 : vector<8xf32> to vector<8x1xf32>
    %25 = vector.broadcast %24 : vector<8x1xf32> to vector<8x128xf32>
    %26 = arith.subf %22, %25 : vector<8x128xf32>
    %27 = math.exp %26 : vector<8x128xf32>
    %cst_18 = arith.constant dense<0.000000e+00> : vector<8xf32>
    %28 = vector.multi_reduction <add>, %27, %cst_18 [1] : vector<8x128xf32> to vector<8xf32>
    %29 = vector.shape_cast %28 : vector<8xf32> to vector<8x1xf32>
    %30 = math.log %29 : vector<8x1xf32>
    %31 = vector.broadcast %30 : vector<8x1xf32> to vector<8x128xf32>
    %32 = arith.subf %26, %31 : vector<8x128xf32>
    %c0_19 = arith.constant 0 : index
    %c0_20 = arith.constant 0 : index
    %33 = vector.load %arg8[%c0_19, %c0_20] : memref<8x128xf32, #tpu.memory_space<vmem>>, vector<8x128xf32>
    tpu.vector_store %arg8[%c0_19, %c0_20], %32 {strides = array<i32>} : memref<8x128xf32, #tpu.memory_space<vmem>>, vector<8x128xf32>,
    return
  }
  func.func @transform_0(%arg0: i32) -> (i32, i32) {
    %c0_i32 = arith.constant 0 : i32
    %c0_i32_0 = arith.constant 0 : i32
    return %arg0, %c0_i32 : i32, i32
  }
  func.func @transform_1(%arg0: i32) -> (i32, i32) {
    %c0_i32 = arith.constant 0 : i32
    %c0_i32_0 = arith.constant 0 : i32
    %c0_i32_1 = arith.constant 0 : i32
    return %c0_i32, %c0_i32_0 : i32, i32
  }
  func.func @transform_2(%arg0: i32) -> (i32, i32) {
    %c0_i32 = arith.constant 0 : i32
    %c0_i32_0 = arith.constant 0 : i32
    %c0_i32_1 = arith.constant 0 : i32
    return %c0_i32, %c0_i32_0 : i32, i32
  }
  func.func @transform_3(%arg0: i32) -> (i32, i32) {
    %c0_i32 = arith.constant 0 : i32
    %c0_i32_0 = arith.constant 0 : i32
    %c0_i32_1 = arith.constant 0 : i32
    return %c0_i32, %c0_i32_0 : i32, i32
  }
  func.func @transform_4(%arg0: i32) -> (i32, i32) {
    %c0_i32 = arith.constant 0 : i32
    %c0_i32_0 = arith.constant 0 : i32
    %c0_i32_1 = arith.constant 0 : i32
    return %c0_i32, %c0_i32_0 : i32, i32
  }
  func.func @transform_5(%arg0: i32) -> (i32, i32) {
    %c0_i32 = arith.constant 0 : i32
    %c0_i32_0 = arith.constant 0 : i32
    %c0_i32_1 = arith.constant 0 : i32
    return %c0_i32, %c0_i32_0 : i32, i32
  }
  func.func @transform_6(%arg0: i32) -> (i32, i32) {
    %c0_i32 = arith.constant 0 : i32
    %c0_i32_0 = arith.constant 0 : i32
    %c0_i32_1 = arith.constant 0 : i32
    return %c0_i32, %c0_i32_0 : i32, i32
  }
  func.func @transform_7(%arg0: i32) -> (i32, i32) {
    %c0_i32 = arith.constant 0 : i32
    %c0_i32_0 = arith.constant 0 : i32
    return %arg0, %c0_i32 : i32, i32
  }
}

</mosaic_0001>

<llo_original>
// kernel: network_forward.1
$region0: #{network_forward.1}
  #allocation0 [shape = 'u32[]', space=smem, size = 0x4, offset = 0x4, fixed_abs, tag = 'smem constant byte address 0x4 - core index']
  #allocation1 [shape = 'u32[72,128]{1,0:T(1,128)}', space=vmem, size = 0x9000, scoped, tag = 'internal scratch']
  %s0 = inlined_call_operand.hbm [shape: f32[8,32], index: 0, kind: input, shape index: {}]
  %s1 = inlined_call_operand.hbm [shape: bf16[32,128], index: 1, kind: input, shape index: {}]
  %s2 = inlined_call_operand.vmem [shape: f32[1,128], index: 2, kind: input, shape index: {}]
  %s3 = inlined_call_operand.hbm [shape: bf16[128,128], index: 3, kind: input, shape index: {}]
  %s4 = inlined_call_operand.vmem [shape: f32[1,128], index: 4, kind: input, shape index: {}]
  %s5 = inlined_call_operand.hbm [shape: bf16[128,128], index: 5, kind: input, shape index: {}]
  %s6 = inlined_call_operand.vmem [shape: f32[1,128], index: 6, kind: input, shape index: {}]
  %s7 = inlined_call_operand.hbm [shape: f32[8,128], index: 7, kind: output, shape index: {}]
  %s8 = sld [smem:[#allocation0]]
  $region54: #{network_forward.1} parent=0
    _
  %s10 = ssub.s32 1, %s8
  %s11 = scalar_select 0, %s10, %s8
  $region1: #{network_forward.1} parent=0
    #allocation2 [shape = 'u8[4096]{0}', space=vmem, size = 0x1000, scoped, tag = 'input window, operand 0, single buffered']
    #allocation3 [shape = 's32[1]{0}', space=sflag, size = 0x4, scoped, tag = 'scoped memory for network_forward.1']
    #allocation4 [shape = 's32[1]{0}', space=sflag, size = 0x4, scoped, tag = 'scoped memory for network_forward.1']
    #allocation5 [shape = 'u8[8192]{0}', space=vmem, size = 0x2000, scoped, tag = 'input window, operand 1, single buffered']
    #allocation6 [shape = 's32[1]{0}', space=sflag, size = 0x4, scoped, tag = 'scoped memory for network_forward.1']
    #allocation7 [shape = 'u8[32768]{0}', space=vmem, size = 0x8000, scoped, tag = 'input window, operand 3, single buffered']
    #allocation8 [shape = 'u8[32768]{0}', space=vmem, size = 0x8000, scoped, tag = 'input window, operand 5, single buffered']
    #allocation9 [shape = 's32[1]{0}', space=sflag, size = 0x4, scoped, tag = 'scoped memory for network_forward.1']
    #allocation10 [shape = 'u8[4096]{0}', space=vmem, size = 0x1000, scoped, tag = 'output window, operand 0, single buffered']
    %12 = vsyncpa [#allocation3], 0
    %13 = vsyncpa [#allocation6], 0
    %14 = vsyncpa [#allocation9], 0
    %15 = vsyncpa [#allocation4], 0
    // Predicated region
    $region2: #{network_forward.1} parent=1 // pred_check
      _
    $region3: #{network_forward.1} parent=1 // pred_check_branch
      %17 = sbr.rel (0) target = $region5
    $region4: #{network_forward.1} parent=1 // pred_region
      %19 = vsyncadd [#allocation3], 0
      %s21 = sshll.u32 %s0, 4
      %s22 = int_to_ptr.hbm [resolvable:$true] %s21
      %s23 = sshll.u32 [#allocation2], 4
      %s24 = int_to_ptr.vmem [resolvable:$true] %s23
      %26 = dma.hbm_to_vmem [thread:$0]  %s22, 128, %s24, [#allocation3]
    $region5: #{network_forward.1} parent=1 // pred_fallthru
      _
    // Predicated region
    $region6: #{network_forward.1} parent=1 // pred_check
      _
    $region7: #{network_forward.1} parent=1 // pred_check_branch
      %28 = sbr.rel (0) target = $region9
    $region8: #{network_forward.1} parent=1 // pred_region
      %30 = vsyncadd [#allocation6], 0
      %s31 = sshll.u32 %s1, 4
      %s32 = int_to_ptr.hbm [resolvable:$true] %s31
      %s33 = sshll.u32 [#allocation5], 4
      %s34 = int_to_ptr.vmem [resolvable:$true] %s33
      %39 = dma.hbm_to_vmem [thread:$0]  %s32, 256, %s34, [#allocation6], 64, 64, 4
    $region9: #{network_forward.1} parent=1 // pred_fallthru
      _
    // Predicated region
    $region10: #{network_forward.1} parent=1 // pred_check
      _
    $region11: #{network_forward.1} parent=1 // pred_check_branch
      %41 = sbr.rel (0) target = $region13
    $region12: #{network_forward.1} parent=1 // pred_region
      _
    $region13: #{network_forward.1} parent=1 // pred_fallthru
      _
    // Predicated region
    $region14: #{network_forward.1} parent=1 // pred_check
      _
    $region15: #{network_forward.1} parent=1 // pred_check_branch
      %43 = sbr.rel (0) target = $region17
    $region16: #{network_forward.1} parent=1 // pred_region
      %45 = vsyncadd [#allocation6], 0
      %s46 = sshll.u32 %s3, 4
      %s47 = int_to_ptr.hbm [resolvable:$true] %s46
      %s48 = sshll.u32 [#allocation7], 4
      %s49 = int_to_ptr.vmem [resolvable:$true] %s48
      %54 = dma.hbm_to_vmem [thread:$0]  %s47, 1024, %s49, [#allocation6], 64, 64, 4
    $region17: #{network_forward.1} parent=1 // pred_fallthru
      _
    // Predicated region
    $region18: #{network_forward.1} parent=1 // pred_check
      _
    $region19: #{network_forward.1} parent=1 // pred_check_branch
      %56 = sbr.rel (0) target = $region21
    $region20: #{network_forward.1} parent=1 // pred_region
      _
    $region21: #{network_forward.1} parent=1 // pred_fallthru
      _
    // Predicated region
    $region22: #{network_forward.1} parent=1 // pred_check
      _
    $region23: #{network_forward.1} parent=1 // pred_check_branch
      %58 = sbr.rel (0) target = $region25
    $region24: #{network_forward.1} parent=1 // pred_region
      %60 = vsyncadd [#allocation9], 0
      %s61 = sshll.u32 %s5, 4
      %s62 = int_to_ptr.hbm [resolvable:$true] %s61
      %s63 = sshll.u32 [#allocation8], 4
      %s64 = int_to_ptr.vmem [resolvable:$true] %s63
      %69 = dma.hbm_to_vmem [thread:$0]  %s62, 1024, %s64, [#allocation9], 64, 64, 4
    $region25: #{network_forward.1} parent=1 // pred_fallthru
      _
    // Predicated region
    $region26: #{network_forward.1} parent=1 // pred_check
      _
    $region27: #{network_forward.1} parent=1 // pred_check_branch
      %71 = sbr.rel (0) target = $region29
    $region28: #{network_forward.1} parent=1 // pred_region
      _
    $region29: #{network_forward.1} parent=1 // pred_fallthru
      _
    // Predicated region
    $region30: #{network_forward.1} parent=1 // pred_check
      _
    $region31: #{network_forward.1} parent=1 // pred_check_branch
      %73 = sbr.rel (0) target = $region33
    $region32: #{network_forward.1} parent=1 // pred_region
      %75 = dma.done [#allocation3], 128
    $region33: #{network_forward.1} parent=1 // pred_fallthru
      _
    // Predicated region
    $region34: #{network_forward.1} parent=1 // pred_check
      _
    $region35: #{network_forward.1} parent=1 // pred_check_branch
      %77 = sbr.rel (0) target = $region37
    $region36: #{network_forward.1} parent=1 // pred_region
      %79 = dma.done [#allocation6], 256
    $region37: #{network_forward.1} parent=1 // pred_fallthru
      _
    // Predicated region
    $region38: #{network_forward.1} parent=1 // pred_check
      _
    $region39: #{network_forward.1} parent=1 // pred_check_branch
      %81 = sbr.rel (0) target = $region41
    $region40: #{network_forward.1} parent=1 // pred_region
      %83 = dma.done [#allocation6], 1024
    $region41: #{network_forward.1} parent=1 // pred_fallthru
      _
    // Predicated region
    $region42: #{network_forward.1} parent=1 // pred_check
      _
    $region43: #{network_forward.1} parent=1 // pred_check_branch
      %85 = sbr.rel (0) target = $region45
    $region44: #{network_forward.1} parent=1 // pred_region
      %87 = dma.done [#allocation9], 1024
    $region45: #{network_forward.1} parent=1 // pred_fallthru
      _
    %v89 = vld [vmem:[#allocation2] sm:$0xff]
    %v90 = vld [vmem:[#allocation5] sm:$0xf]
    %v91 = vld [vmem:[#allocation5 + $0x4] sm:$0xf]
    %v92 = vld [vmem:[#allocation5 + $0x8] sm:$0xf]
    %v93 = vld [vmem:[#allocation5 + $0xc] sm:$0xf]
    %v94 = vld [vmem:[%s2] sm:$0x1]
    %v95 = vpack.c.bf16 %v89, %v89
    %v97 = vperm.slane %v94, 0
    %v103 = vunpack.c.l.b16 %v90
    %v104 = vunpack.c.l.b16 %v91
    %v105 = vunpack.c.l.b16 %v92
    %v106 = vunpack.c.l.b16 %v93
    %v107 = vpack.c.b16 %v104, %v103
    %v108 = vpack.c.b16 %v106, %v105
    %vm111 = vcmask 261120
    %v113 = vsel %vm111, %v95, 0
    %115 = vmatpush.bf16.msra.mxu0 0
    %116 = vmatpush.bf16.msra.mxu0 0
    %117 = vmatpush.bf16.msra.mxu0 0
    %118 = vmatpush.bf16.msra.mxu0 0
    %119 = vmatpush.bf16.msra.mxu0 0
    %120 = vmatpush.bf16.msra.mxu0 0
    %121 = vmatpush.bf16.msra.mxu0 %v108
    %122 = vmatpush.bf16.msra.mxu0 %v107
    %123 = vmatmul.bf16.gmra.mxu0 %v113
    %v124 = vpop.f32.mrf.mxu0
    %v125 = vadd.f32 %v97, %v124
    %v126 = vpop.f32.mrf.mxu0
    %127 = vdwg.mxu0
    %v128 = vmax.f32 %v125, 0.0
    %v129 = vld [vmem:[#allocation7] sm:$0xf]
    %v130 = vld [vmem:[#allocation7 + $0x4] sm:$0xf]
    %v131 = vld [vmem:[#allocation7 + $0x8] sm:$0xf]
    %v132 = vld [vmem:[#allocation7 + $0xc] sm:$0xf]
    %v133 = vld [vmem:[#allocation7 + $0x10] sm:$0xf]
    %v134 = vld [vmem:[#allocation7 + $0x14] sm:$0xf]
    %v135 = vld [vmem:[#allocation7 + $0x18] sm:$0xf]
    %v136 = vld [vmem:[#allocation7 + $0x1c] sm:$0xf]
    %v137 = vld [vmem:[#allocation7 + $0x20] sm:$0xf]
    %v138 = vld [vmem:[#allocation7 + $0x24] sm:$0xf]
    %v139 = vld [vmem:[#allocation7 + $0x28] sm:$0xf]
    %v140 = vld [vmem:[#allocation7 + $0x2c] sm:$0xf]
    %v141 = vld [vmem:[#allocation7 + $0x30] sm:$0xf]
    %v142 = vld [vmem:[#allocation7 + $0x34] sm:$0xf]
    %v143 = vld [vmem:[#allocation7 + $0x38] sm:$0xf]
    %v144 = vld [vmem:[#allocation7 + $0x3c] sm:$0xf]
    %v145 = vld [vmem:[%s4] sm:$0x1]
    %v146 = vpack.c.bf16 %v128, %v128
    %v148 = vperm.slane %v145, 0
    %v166 = vunpack.c.l.b16 %v129
    %v167 = vunpack.c.l.b16 %v130
    %v168 = vunpack.c.l.b16 %v131
    %v169 = vunpack.c.l.b16 %v132
    %v170 = vunpack.c.l.b16 %v133
    %v171 = vunpack.c.l.b16 %v134
    %v172 = vunpack.c.l.b16 %v135
    %v173 = vunpack.c.l.b16 %v136
    %v174 = vunpack.c.l.b16 %v137
    %v175 = vunpack.c.l.b16 %v138
    %v176 = vunpack.c.l.b16 %v139
    %v177 = vunpack.c.l.b16 %v140
    %v178 = vunpack.c.l.b16 %v141
    %v179 = vunpack.c.l.b16 %v142
    %v180 = vunpack.c.l.b16 %v143
    %v181 = vunpack.c.l.b16 %v144
    %v182 = vpack.c.b16 %v167, %v166
    %v183 = vpack.c.b16 %v169, %v168
    %v184 = vpack.c.b16 %v171, %v170
    %v185 = vpack.c.b16 %v173, %v172
    %v186 = vpack.c.b16 %v175, %v174
    %v187 = vpack.c.b16 %v177, %v176
    %v188 = vpack.c.b16 %v179, %v178
    %v189 = vpack.c.b16 %v181, %v180
    %198 = vmatpush.bf16.msra.mxu0 %v189
    %199 = vmatpush.bf16.msra.mxu0 %v188
    %200 = vmatpush.bf16.msra.mxu0 %v187
    %201 = vmatpush.bf16.msra.mxu0 %v186
    %202 = vmatpush.bf16.msra.mxu0 %v185
    %203 = vmatpush.bf16.msra.mxu0 %v184
    %204 = vmatpush.bf16.msra.mxu0 %v183
    %205 = vmatpush.bf16.msra.mxu0 %v182
    %206 = vmatmul.bf16.gmra.mxu0 %v146
    %v207 = vpop.f32.mrf.mxu0
    %v208 = vadd.f32 %v148, %v207
    %v209 = vpop.f32.mrf.mxu0
    %210 = vdwg.mxu0
    %v211 = vmax.f32 %v208, 0.0
    %v212 = vld [vmem:[#allocation8] sm:$0xf]
    %v213 = vld [vmem:[#allocation8 + $0x4] sm:$0xf]
    %v214 = vld [vmem:[#allocation8 + $0x8] sm:$0xf]
    %v215 = vld [vmem:[#allocation8 + $0xc] sm:$0xf]
    %v216 = vld [vmem:[#allocation8 + $0x10] sm:$0xf]
    %v217 = vld [vmem:[#allocation8 + $0x14] sm:$0xf]
    %v218 = vld [vmem:[#allocation8 + $0x18] sm:$0xf]
    %v219 = vld [vmem:[#allocation8 + $0x1c] sm:$0xf]
    %v220 = vld [vmem:[#allocation8 + $0x20] sm:$0xf]
    %v221 = vld [vmem:[#allocation8 + $0x24] sm:$0xf]
    %v222 = vld [vmem:[#allocation8 + $0x28] sm:$0xf]
    %v223 = vld [vmem:[#allocation8 + $0x2c] sm:$0xf]
    %v224 = vld [vmem:[#allocation8 + $0x30] sm:$0xf]
    %v225 = vld [vmem:[#allocation8 + $0x34] sm:$0xf]
    %v226 = vld [vmem:[#allocation8 + $0x38] sm:$0xf]
    %v227 = vld [vmem:[#allocation8 + $0x3c] sm:$0xf]
    %v228 = vld [vmem:[%s6] sm:$0x1]
    %v229 = vpack.c.bf16 %v211, %v211
    %v231 = vperm.slane %v228, 0
    %v249 = vunpack.c.l.b16 %v212
    %v250 = vunpack.c.l.b16 %v213
    %v251 = vunpack.c.l.b16 %v214
    %v252 = vunpack.c.l.b16 %v215
    %v253 = vunpack.c.l.b16 %v216
    %v254 = vunpack.c.l.b16 %v217
    %v255 = vunpack.c.l.b16 %v218
    %v256 = vunpack.c.l.b16 %v219
    %v257 = vunpack.c.l.b16 %v220
    %v258 = vunpack.c.l.b16 %v221
    %v259 = vunpack.c.l.b16 %v222
    %v260 = vunpack.c.l.b16 %v223
    %v261 = vunpack.c.l.b16 %v224
    %v262 = vunpack.c.l.b16 %v225
    %v263 = vunpack.c.l.b16 %v226
    %v264 = vunpack.c.l.b16 %v227
    %v265 = vpack.c.b16 %v250, %v249
    %v266 = vpack.c.b16 %v252, %v251
    %v267 = vpack.c.b16 %v254, %v253
    %v268 = vpack.c.b16 %v256, %v255
    %v269 = vpack.c.b16 %v258, %v257
    %v270 = vpack.c.b16 %v260, %v259
    %v271 = vpack.c.b16 %v262, %v261
    %v272 = vpack.c.b16 %v264, %v263
    %281 = vmatpush.bf16.msra.mxu0 %v272
    %282 = vmatpush.bf16.msra.mxu0 %v271
    %283 = vmatpush.bf16.msra.mxu0 %v270
    %284 = vmatpush.bf16.msra.mxu0 %v269
    %285 = vmatpush.bf16.msra.mxu0 %v268
    %286 = vmatpush.bf16.msra.mxu0 %v267
    %287 = vmatpush.bf16.msra.mxu0 %v266
    %288 = vmatpush.bf16.msra.mxu0 %v265
    %289 = vmatmul.bf16.gmra.mxu0 %v229
    %v290 = vpop.f32.mrf.mxu0
    %v291 = vadd.f32 %v231, %v290
    %v292 = vpop.f32.mrf.mxu0
    %293 = vdwg.mxu0
    %294 = vmax.xlane.f32.xlu0 %v291
    %v295 = vpop.xlane.xlu0 %294
    %v296 = vsub.f32 %v291, %v295
    %v297 = vmul.f32 %v296, 1.442695
    %v298 = vpow.pop %v297
    %299 = vadd.xlane.f32.xlu0 %v298
    %v300 = vpop.xlane.xlu0 %299
    %v301 = vlog2.pop %v300
    %v302 = vmul.f32 %v301, 0.6931472
    %v303 = vsub.f32 %v296, %v302
    %304 = vst [vmem:[#allocation10] sm:$0xff] %v303
    // Predicated region
    $region46: #{network_forward.1} parent=1 // pred_check
      _
    $region47: #{network_forward.1} parent=1 // pred_check_branch
      %306 = sbr.rel (0) target = $region49
    $region48: #{network_forward.1} parent=1 // pred_region
      %308 = vsyncadd [#allocation4], 0
      %s310 = sshll.u32 [#allocation10], 4
      %s311 = int_to_ptr.vmem [resolvable:$true] %s310
      %s312 = sshll.u32 %s7, 4
      %s313 = int_to_ptr.hbm [resolvable:$true] %s312
      %315 = dma.vmem_to_hbm [thread:$0]  %s311, 128, %s313, [#allocation4]
    $region49: #{network_forward.1} parent=1 // pred_fallthru
      _
    // Predicated region
    $region50: #{network_forward.1} parent=1 // pred_check
      _
    $region51: #{network_forward.1} parent=1 // pred_check_branch
      %317 = sbr.rel (0) target = $region53
    $region52: #{network_forward.1} parent=1 // pred_region
      %319 = dma.done [#allocation4], 128
    $region53: #{network_forward.1} parent=1 // pred_fallthru
      _
    %320 = vsyncpa [#allocation3], 1
    %321 = vsyncpa [#allocation6], 1
    %322 = vsyncpa [#allocation9], 1
    %323 = vsyncpa [#allocation4], 1

</llo_original>
